<compile_context>
chip_gen: v5e
topology: v5e:2x2
jax: 0.10.0
libtpu: 0.0.40
codegen_flags: <defaults>
</compile_context>

<pallas_src>
import functools

import jax
import jax.numpy as jnp
from jax.experimental import pallas as pl
from jax.experimental.pallas import tpu as pltpu

C1 = 32          # conv1 out channels
C2 = 64          # conv2 out channels
L = 2            # conv "length" axis (fixed by reshape(-1, 1, 2))
UP_H = 60        # nearest-upsample scale on the 64-channel ("H") axis
UP_W = 2         # nearest-upsample scale on the length-2 ("W") axis
LANES = 128      # lane width of the lane-dense output layout
GROUP = L * UP_W                        # 4 output values per (sample, H) row
OUT_ROWS = C2 * UP_H * GROUP // LANES   # 120 lane-dense rows per sample


def upsampling_kernel(x_ref, sel_ref, wmap_ref, bmap_ref, o_ref):
    # x_ref   : (B, 1, 2)      B samples, the two conv-input values each
    # sel_ref : (1, 1, 128)    1.0 where the lane takes x[..., 0], else 0.0
    # wmap_ref: (1, 120, 128)  weff replicated into the lane-dense layout
    # bmap_ref: (1, 120, 128)  beff replicated into the lane-dense layout
    # o_ref   : (B, 120, 128)  lane-dense upsampled output
    sel = sel_ref[...]                        # (1, 1, 128)
    x0 = x_ref[:, :, 0:1]                     # (B, 1, 1)
    x1 = x_ref[:, :, 1:2]                     # (B, 1, 1)
    xl = x0 * sel + x1 * (1.0 - sel)          # (B, 1, 128): per-lane x value
    # Collapsed conv + both nearest upsamples as one broadcast multiply-add.
    o_ref[...] = (xl * wmap_ref[...] + bmap_ref[...]).astype(o_ref.dtype)


@functools.partial(jax.jit, static_argnames=("block_b", "out_dtype"))
def upsampling_forward(y, w1, b1, w2, b2, *, block_b=128,
                       out_dtype=jnp.float32):
    """Pallas equivalent of Upsampling.forward.

    y : any-shape float array with numel divisible by 2.
    w1: (32,1,1)  b1: (32,)  w2: (64,32,1)  b2: (64,)
    returns (N, 1, 3840, 4) with N = y.size // 2  (matches PyTorch).
    out_dtype=jnp.bfloat16 is an opt-in ~2x writeback win (changes numerics).
    """
    flat = y.reshape(-1).astype(jnp.float32)
    assert flat.shape[0] % L == 0, "input numel must be divisible by 2"
    n = flat.shape[0] // L
    x = flat.reshape(n, 1, L)

    # Collapse the two 1x1 convs (C_in = 1) into one per-channel affine.
    w1v = w1.reshape(C1).astype(jnp.float32)
    b1v = b1.reshape(C1).astype(jnp.float32)
    w2m = w2.reshape(C2, C1).astype(jnp.float32)
    b2v = b2.reshape(C2).astype(jnp.float32)
    weff = w2m @ w1v                 # (64,)
    beff = w2m @ b1v + b2v           # (64,)

    # Lane-dense replication maps.  Per sample, flattened output index
    # k = row*128 + lane  <->  h = k // 4, w = k % 4, channel = h // 60.
    r = jnp.arange(OUT_ROWS, dtype=jnp.int32)[:, None]      # (120, 1)
    lane = jnp.arange(LANES, dtype=jnp.int32)[None, :]      # (1, 128)
    ch = (r * (LANES // GROUP) + lane // GROUP) // UP_H     # (120, 128)
    wmap = weff[ch][None]                                   # (1, 120, 128)
    bmap = beff[ch][None]                                   # (1, 120, 128)
    sel = ((lane % GROUP) < UP_W).astype(jnp.float32)[None]  # (1, 1, 128)

    # Block-size policy:
    #  * B = block_b (128) for large n: ~7.5 MiB lane-dense writeback per
    #    step amortizes the fixed per-step overhead.
    #  * For n < 2*block_b shrink B so the parallel grid has >= 2 steps and
    #    both v7x TensorCores get work (costs at most one extra tiny step
    #    on single-core v5e/v6e).
    #  * Ragged last block (n % B != 0) is masked by Pallas — no padding,
    #    no post-kernel slice/copy of the dominant output tensor.
    if n >= 2 * block_b:
        B = block_b
    else:
        B = max(8, -(-n // 2))
    B = max(1, min(B, n))
    grid = (pl.cdiv(n, B),)

    cost = pl.CostEstimate(
        flops=2 * n * OUT_ROWS * LANES,
        transcendentals=0,
        bytes_accessed=4 * (n * OUT_ROWS * LANES      # output writeback (dominant)
                            + n * L                   # input
                            + 2 * OUT_ROWS * LANES    # wmap + bmap
                            + LANES),                 # sel
    )

    out = pl.pallas_call(
        upsampling_kernel,
        out_shape=jax.ShapeDtypeStruct((n, OUT_ROWS, LANES), out_dtype),
        grid_spec=pltpu.PrefetchScalarGridSpec(
            num_scalar_prefetch=0,
            grid=grid,
            in_specs=[
                pl.BlockSpec((B, 1, L), lambda i: (i, 0, 0)),
                pl.BlockSpec((1, 1, LANES), lambda i: (0, 0, 0)),
                pl.BlockSpec((1, OUT_ROWS, LANES), lambda i: (0, 0, 0)),
                pl.BlockSpec((1, OUT_ROWS, LANES), lambda i: (0, 0, 0)),
            ],
            out_specs=pl.BlockSpec((B, OUT_ROWS, LANES),
                                   lambda i: (i, 0, 0)),
        ),
        compiler_params=pltpu.CompilerParams(
            dimension_semantics=("parallel",),
            vmem_limit_bytes=32 * 1024 * 1024,
        ),
        cost_estimate=cost,
    )(x, sel, wmap, bmap)

    # (n, 120, 128) and (n, 1, 3840, 4) share the same row-major order:
    # pure view reshape (free under jit), no padded samples to slice away.
    return out.reshape(n, 1, C2 * UP_H, L * UP_W)


def upsampling_ref(y, w1, b1, w2, b2):
    """Pure-JAX reference (mirrors the PyTorch module op-for-op)."""
    flat = y.reshape(-1).astype(jnp.float32)
    n = flat.shape[0] // L
    x = flat.reshape(n, 1, L)
    h = jnp.einsum("oc,ncl->nol", w1.reshape(C1, 1), x) + b1.reshape(1, C1, 1)
    c = jnp.einsum("oc,ncl->nol", w2.reshape(C2, C1), h) + b2.reshape(1, C2, 1)
    c = c.reshape(n, 1, C2, L)
    return jnp.repeat(jnp.repeat(c, UP_H, axis=2), UP_W, axis=3)


if __name__ == "__main__":
    key = jax.random.PRNGKey(0)
    k_y, k_w1, k_b1, k_w2, k_b2 = jax.random.split(key, 5)

    # deterministic synthetic parameters (shapes from nn.Conv1d in __init__)
    w1 = jax.random.normal(k_w1, (C1, 1, 1), jnp.float32) * 0.5
    b1 = jax.random.normal(k_b1, (C1,), jnp.float32) * 0.1
    w2 = jax.random.normal(k_w2, (C2, C1, 1), jnp.float32) * 0.1
    b2 = jax.random.normal(k_b2, (C2,), jnp.float32) * 0.1

    # Case 1: tiny input (numel=16 -> N=8 samples, single grid step).
    y1 = jax.random.normal(k_y, (2, 4, 2), jnp.float32)
    out1 = jax.block_until_ready(upsampling_forward(y1, w1, b1, w2, b2))
    ref1 = upsampling_ref(y1, w1, b1, w2, b2)
    assert out1.shape == (y1.size // L, 1, C2 * UP_H, L * UP_W), out1.shape
    assert jnp.allclose(out1, ref1, atol=1e-4, rtol=1e-4), "case 1 mismatch"

    # Case 2: ragged input (numel=70 -> N=35 samples, 2 grid steps,
    # partial last block masked by Pallas — exercises the no-padding path).
    y2 = jax.random.normal(jax.random.fold_in(k_y, 1), (2, 5, 7), jnp.float32)
    out2 = jax.block_until_ready(upsampling_forward(y2, w1, b1, w2, b2))
    ref2 = upsampling_ref(y2, w1, b1, w2, b2)
    assert out2.shape == (y2.size // L, 1, C2 * UP_H, L * UP_W), out2.shape
    assert jnp.allclose(out2, ref2, atol=1e-4, rtol=1e-4), "case 2 mismatch"

    print("KERNEL_OK")
</pallas_src>

<mosaic_0001>
module attributes {stable_mosaic.version = 11 : i64} {
  func.func @upsampling_kernel(%arg0: i32, %arg1: memref<8x1x2xf32, #tpu.memory_space<vmem>>, %arg2: memref<1x1x128xf32, #tpu.memory_space<vmem>>, %arg3: memref<1x120x128xf32, #tpu.memory_space<vmem>>, %arg4: memref<1x120x128xf32, #tpu.memory_space<vmem>>, %arg5: memref<8x120x128xf32, #tpu.memory_space<vmem>>) attributes {dimension_semantics = [#tpu.dimension_semantics<parallel>], iteration_bounds = array<i64: 1>, scalar_prefetch = 0 : i64, scratch_operands = 0 : i64, tpu.core_type = #tpu.core_type<tc>, window_params = [{transform_indices = @transform_0, window_bounds = array<i64: 8, 1, 2>}, {pipeline_mode = #tpu.pipeline_mode<synchronous>, transform_indices = @transform_1, window_bounds = array<i64: 1, 1, 128>}, {pipeline_mode = #tpu.pipeline_mode<synchronous>, transform_indices = @transform_2, window_bounds = array<i64: 1, 120, 128>}, {pipeline_mode = #tpu.pipeline_mode<synchronous>, transform_indices = @transform_3, window_bounds = array<i64: 1, 120, 128>}, {transform_indices = @transform_4, window_bounds = array<i64: 8, 120, 128>}]} {
    %c0 = arith.constant 0 : index
    %c0_0 = arith.constant 0 : index
    %c0_1 = arith.constant 0 : index
    %0 = vector.load %arg2[%c0, %c0_0, %c0_1] : memref<1x1x128xf32, #tpu.memory_space<vmem>>, vector<1x1x128xf32>
    %c0_2 = arith.constant 0 : index
    %c0_3 = arith.constant 0 : index
    %c0_4 = arith.constant 0 : index
    %1 = vector.load %arg1[%c0_2, %c0_3, %c0_4] : memref<8x1x2xf32, #tpu.memory_space<vmem>>, vector<8x1x1xf32>
    %c0_5 = arith.constant 0 : index
    %c0_6 = arith.constant 0 : index
    %c1 = arith.constant 1 : index
    %2 = vector.load %arg1[%c0_5, %c0_6, %c1] : memref<8x1x2xf32, #tpu.memory_space<vmem>>, vector<8x1x1xf32>
    %3 = vector.broadcast %1 : vector<8x1x1xf32> to vector<8x1x128xf32>
    %4 = vector.broadcast %0 : vector<1x1x128xf32> to vector<8x1x128xf32>
    %5 = arith.mulf %3, %4 : vector<8x1x128xf32>
    %cst = arith.constant 1.000000e+00 : f32
    %6 = vector.broadcast %cst : f32 to vector<1x1x128xf32>
    %7 = arith.subf %6, %0 : vector<1x1x128xf32>
    %8 = vector.broadcast %2 : vector<8x1x1xf32> to vector<8x1x128xf32>
    %9 = vector.broadcast %7 : vector<1x1x128xf32> to vector<8x1x128xf32>
    %10 = arith.mulf %8, %9 : vector<8x1x128xf32>
    %11 = arith.addf %5, %10 : vector<8x1x128xf32>
    %c0_7 = arith.constant 0 : index
    %c0_8 = arith.constant 0 : index
    %c0_9 = arith.constant 0 : index
    %12 = vector.load %arg3[%c0_7, %c0_8, %c0_9] : memref<1x120x128xf32, #tpu.memory_space<vmem>>, vector<1x120x128xf32>
    %13 = vector.broadcast %11 : vector<8x1x128xf32> to vector<8x120x128xf32>
    %14 = vector.broadcast %12 : vector<1x120x128xf32> to vector<8x120x128xf32>
    %15 = arith.mulf %13, %14 : vector<8x120x128xf32>
    %c0_10 = arith.constant 0 : index
    %c0_11 = arith.constant 0 : index
    %c0_12 = arith.constant 0 : index
    %16 = vector.load %arg4[%c0_10, %c0_11, %c0_12] : memref<1x120x128xf32, #tpu.memory_space<vmem>>, vector<1x120x128xf32>
    %17 = vector.broadcast %16 : vector<1x120x128xf32> to vector<8x120x128xf32>
    %18 = arith.addf %15, %17 : vector<8x120x128xf32>
    %c0_13 = arith.constant 0 : index
    %c0_14 = arith.constant 0 : index
    %c0_15 = arith.constant 0 : index
    %19 = vector.load %arg5[%c0_13, %c0_14, %c0_15] : memref<8x120x128xf32, #tpu.memory_space<vmem>>, vector<8x120x128xf32>
    tpu.vector_store %arg5[%c0_13, %c0_14, %c0_15], %18 {strides = array<i32>} : memref<8x120x128xf32, #tpu.memory_space<vmem>>, vector<8x120x128xf32>,
    return
  }
  func.func @transform_0(%arg0: i32) -> (i32, i32, i32) {
    %c0_i32 = arith.constant 0 : i32
    %c0_i32_0 = arith.constant 0 : i32
    %c0_i32_1 = arith.constant 0 : i32
    return %arg0, %c0_i32, %c0_i32_0 : i32, i32, i32
  }
  func.func @transform_1(%arg0: i32) -> (i32, i32, i32) {
    %c0_i32 = arith.constant 0 : i32
    %c0_i32_0 = arith.constant 0 : i32
    %c0_i32_1 = arith.constant 0 : i32
    %c0_i32_2 = arith.constant 0 : i32
    return %c0_i32, %c0_i32_0, %c0_i32_1 : i32, i32, i32
  }
  func.func @transform_2(%arg0: i32) -> (i32, i32, i32) {
    %c0_i32 = arith.constant 0 : i32
    %c0_i32_0 = arith.constant 0 : i32
    %c0_i32_1 = arith.constant 0 : i32
    %c0_i32_2 = arith.constant 0 : i32
    return %c0_i32, %c0_i32_0, %c0_i32_1 : i32, i32, i32
  }
  func.func @transform_3(%arg0: i32) -> (i32, i32, i32) {
    %c0_i32 = arith.constant 0 : i32
    %c0_i32_0 = arith.constant 0 : i32
    %c0_i32_1 = arith.constant 0 : i32
    %c0_i32_2 = arith.constant 0 : i32
    return %c0_i32, %c0_i32_0, %c0_i32_1 : i32, i32, i32
  }
  func.func @transform_4(%arg0: i32) -> (i32, i32, i32) {
    %c0_i32 = arith.constant 0 : i32
    %c0_i32_0 = arith.constant 0 : i32
    %c0_i32_1 = arith.constant 0 : i32
    return %arg0, %c0_i32, %c0_i32_0 : i32, i32, i32
  }
}

</mosaic_0001>

<llo_original>
// kernel: upsampling_forward.1
$region0: #{upsampling_forward.1}
  #allocation0 [shape = 'u32[]', space=smem, size = 0x4, offset = 0x4, fixed_abs, tag = 'smem constant byte address 0x4 - core index']
  #allocation1 [shape = 'u32[72,128]{1,0:T(1,128)}', space=vmem, size = 0x9000, scoped, tag = 'internal scratch']
  %s0 = inlined_call_operand.vmem [shape: f32[8,1,2], index: 0, kind: input, shape index: {}]
  %s1 = inlined_call_operand.vmem [shape: f32[1,1,128], index: 1, kind: input, shape index: {}]
  %s2 = inlined_call_operand.vmem [shape: f32[1,120,128], index: 2, kind: input, shape index: {}]
  %s3 = inlined_call_operand.vmem [shape: f32[1,120,128], index: 3, kind: input, shape index: {}]
  %s4 = inlined_call_operand.vmem [shape: f32[8,120,128], index: 4, kind: output, shape index: {}]
  %s5 = sld [smem:[#allocation0]]
  $region26: #{upsampling_forward.1} parent=0
    _
  %s7 = ssub.s32 1, %s5
  %s8 = scalar_select 0, %s7, %s5
  // Predicated region
  $region2: #{upsampling_forward.1} parent=0 // pred_check
    _
  $region3: #{upsampling_forward.1} parent=0 // pred_check_branch
    %10 = sbr.rel (0) target = $region5
  $region4: #{upsampling_forward.1} parent=0 // pred_region
    _
  $region5: #{upsampling_forward.1} parent=0 // pred_fallthru
    _
  // Predicated region
  $region6: #{upsampling_forward.1} parent=0 // pred_check
    _
  $region7: #{upsampling_forward.1} parent=0 // pred_check_branch
    %12 = sbr.rel (0) target = $region9
  $region8: #{upsampling_forward.1} parent=0 // pred_region
    _
  $region9: #{upsampling_forward.1} parent=0 // pred_fallthru
    _
  // Predicated region
  $region10: #{upsampling_forward.1} parent=0 // pred_check
    _
  $region11: #{upsampling_forward.1} parent=0 // pred_check_branch
    %14 = sbr.rel (0) target = $region13
  $region12: #{upsampling_forward.1} parent=0 // pred_region
    _
  $region13: #{upsampling_forward.1} parent=0 // pred_fallthru
    _
  // Predicated region
  $region14: #{upsampling_forward.1} parent=0 // pred_check
    _
  $region15: #{upsampling_forward.1} parent=0 // pred_check_branch
    %16 = sbr.rel (0) target = $region17
  $region16: #{upsampling_forward.1} parent=0 // pred_region
    _
  $region17: #{upsampling_forward.1} parent=0 // pred_fallthru
    _
  %v17 = vld [vmem:[%s1] sm:$0x1]
  %v18 = vld [vmem:[%s0] sm:$0x1]
  %v19 = vld [vmem:[%s0 + $0x1] sm:$0x1]
  %v20 = vld [vmem:[%s0 + $0x2] sm:$0x1]
  %v21 = vld [vmem:[%s0 + $0x3] sm:$0x1]
  %v22 = vld [vmem:[%s0 + $0x4] sm:$0x1]
  %v23 = vld [vmem:[%s0 + $0x5] sm:$0x1]
  %v24 = vld [vmem:[%s0 + $0x6] sm:$0x1]
  %v25 = vld [vmem:[%s0 + $0x7] sm:$0x1]
  %27 = vset.pattern.permute.xlu0 0
  %28 = vperm.xlu0 %27, %v18
  %v29 = vpop.permute.xlu0 %28
  %v31 = vperm.slane %v29, 0
  %33 = vset.pattern.permute.xlu0 0
  %34 = vperm.xlu0 %33, %v19
  %v35 = vpop.permute.xlu0 %34
  %v37 = vperm.slane %v35, 0
  %39 = vset.pattern.permute.xlu0 0
  %40 = vperm.xlu0 %39, %v20
  %v41 = vpop.permute.xlu0 %40
  %v43 = vperm.slane %v41, 0
  %45 = vset.pattern.permute.xlu0 0
  %46 = vperm.xlu0 %45, %v21
  %v47 = vpop.permute.xlu0 %46
  %v49 = vperm.slane %v47, 0
  %51 = vset.pattern.permute.xlu0 0
  %52 = vperm.xlu0 %51, %v22
  %v53 = vpop.permute.xlu0 %52
  %v55 = vperm.slane %v53, 0
  %57 = vset.pattern.permute.xlu0 0
  %58 = vperm.xlu0 %57, %v23
  %v59 = vpop.permute.xlu0 %58
  %v61 = vperm.slane %v59, 0
  %63 = vset.pattern.permute.xlu0 0
  %64 = vperm.xlu0 %63, %v24
  %v65 = vpop.permute.xlu0 %64
  %v67 = vperm.slane %v65, 0
  %69 = vset.pattern.permute.xlu0 0
  %70 = vperm.xlu0 %69, %v25
  %v71 = vpop.permute.xlu0 %70
  %v73 = vperm.slane %v71, 0
  %v74 = vmul.f32 %v31, %v17
  %v75 = vmul.f32 %v37, %v17
  %v76 = vmul.f32 %v43, %v17
  %v77 = vmul.f32 %v49, %v17
  %v78 = vmul.f32 %v55, %v17
  %v79 = vmul.f32 %v61, %v17
  %v80 = vmul.f32 %v67, %v17
  %v81 = vmul.f32 %v73, %v17
  %v82 = vsub.f32 1.0, %v17
  %83 = vset.pattern.permute.xlu0 1
  %84 = vperm.xlu0 %83, %v18
  %v85 = vpop.permute.xlu0 %84
  %v87 = vperm.slane %v85, 0
  %88 = vset.pattern.permute.xlu0 1
  %89 = vperm.xlu0 %88, %v19
  %v90 = vpop.permute.xlu0 %89
  %v92 = vperm.slane %v90, 0
  %93 = vset.pattern.permute.xlu0 1
  %94 = vperm.xlu0 %93, %v20
  %v95 = vpop.permute.xlu0 %94
  %v97 = vperm.slane %v95, 0
  %98 = vset.pattern.permute.xlu0 1
  %99 = vperm.xlu0 %98, %v21
  %v100 = vpop.permute.xlu0 %99
  %v102 = vperm.slane %v100, 0
  %103 = vset.pattern.permute.xlu0 1
  %104 = vperm.xlu0 %103, %v22
  %v105 = vpop.permute.xlu0 %104
  %v107 = vperm.slane %v105, 0
  %108 = vset.pattern.permute.xlu0 1
  %109 = vperm.xlu0 %108, %v23
  %v110 = vpop.permute.xlu0 %109
  %v112 = vperm.slane %v110, 0
  %113 = vset.pattern.permute.xlu0 1
  %114 = vperm.xlu0 %113, %v24
  %v115 = vpop.permute.xlu0 %114
  %v117 = vperm.slane %v115, 0
  %118 = vset.pattern.permute.xlu0 1
  %119 = vperm.xlu0 %118, %v25
  %v120 = vpop.permute.xlu0 %119
  %v122 = vperm.slane %v120, 0
  %v123 = vmul.f32 %v87, %v82
  %v124 = vmul.f32 %v92, %v82
  %v125 = vmul.f32 %v97, %v82
  %v126 = vmul.f32 %v102, %v82
  %v127 = vmul.f32 %v107, %v82
  %v128 = vmul.f32 %v112, %v82
  %v129 = vmul.f32 %v117, %v82
  %v130 = vmul.f32 %v122, %v82
  %v131 = vadd.f32 %v74, %v123
  %v132 = vadd.f32 %v75, %v124
  %v133 = vadd.f32 %v76, %v125
  %v134 = vadd.f32 %v77, %v126
  %v135 = vadd.f32 %v78, %v127
  %v136 = vadd.f32 %v79, %v128
  %v137 = vadd.f32 %v80, %v129
  %v138 = vadd.f32 %v81, %v130
  %v139 = vld [vmem:[%s2] sm:$0xff]
  %v140 = vld [vmem:[%s2 + $0x8] sm:$0xff]
  %v141 = vld [vmem:[%s2 + $0x10] sm:$0xff]
  %v142 = vld [vmem:[%s2 + $0x18] sm:$0xff]
  %v143 = vld [vmem:[%s2 + $0x20] sm:$0xff]
  %v144 = vld [vmem:[%s2 + $0x28] sm:$0xff]
  %v145 = vld [vmem:[%s2 + $0x30] sm:$0xff]
  %v146 = vld [vmem:[%s2 + $0x38] sm:$0xff]
  %v147 = vld [vmem:[%s2 + $0x40] sm:$0xff]
  %v148 = vld [vmem:[%s2 + $0x48] sm:$0xff]
  %v149 = vld [vmem:[%s2 + $0x50] sm:$0xff]
  %v150 = vld [vmem:[%s2 + $0x58] sm:$0xff]
  %v151 = vld [vmem:[%s2 + $0x60] sm:$0xff]
  %v152 = vld [vmem:[%s2 + $0x68] sm:$0xff]
  %v153 = vld [vmem:[%s2 + $0x70] sm:$0xff]
  %v162 = vperm.slane %v131, 0
  %v163 = vperm.slane %v132, 0
  %v164 = vperm.slane %v133, 0
  %v165 = vperm.slane %v134, 0
  %v166 = vperm.slane %v135, 0
  %v167 = vperm.slane %v136, 0
  %v168 = vperm.slane %v137, 0
  %v169 = vperm.slane %v138, 0
  %v178 = vmul.f32 %v162, %v139
  %v179 = vmul.f32 %v162, %v140
  %v180 = vmul.f32 %v162, %v141
  %v181 = vmul.f32 %v162, %v142
  %v182 = vmul.f32 %v162, %v143
  %v183 = vmul.f32 %v162, %v144
  %v184 = vmul.f32 %v162, %v145
  %v185 = vmul.f32 %v162, %v146
  %v186 = vmul.f32 %v162, %v147
  %v187 = vmul.f32 %v162, %v148
  %v188 = vmul.f32 %v162, %v149
  %v189 = vmul.f32 %v162, %v150
  %v190 = vmul.f32 %v162, %v151
  %v191 = vmul.f32 %v162, %v152
  %v192 = vmul.f32 %v162, %v153
  %v193 = vmul.f32 %v163, %v139
  %v194 = vmul.f32 %v163, %v140
  %v195 = vmul.f32 %v163, %v141
  %v196 = vmul.f32 %v163, %v142
  %v197 = vmul.f32 %v163, %v143
  %v198 = vmul.f32 %v163, %v144
  %v199 = vmul.f32 %v163, %v145
  %v200 = vmul.f32 %v163, %v146
  %v201 = vmul.f32 %v163, %v147
  %v202 = vmul.f32 %v163, %v148
  %v203 = vmul.f32 %v163, %v149
  %v204 = vmul.f32 %v163, %v150
  %v205 = vmul.f32 %v163, %v151
  %v206 = vmul.f32 %v163, %v152
  %v207 = vmul.f32 %v163, %v153
  %v208 = vmul.f32 %v164, %v139
  %v209 = vmul.f32 %v164, %v140
  %v210 = vmul.f32 %v164, %v141
  %v211 = vmul.f32 %v164, %v142
  %v212 = vmul.f32 %v164, %v143
  %v213 = vmul.f32 %v164, %v144
  %v214 = vmul.f32 %v164, %v145
  %v215 = vmul.f32 %v164, %v146
  %v216 = vmul.f32 %v164, %v147
  %v217 = vmul.f32 %v164, %v148
  %v218 = vmul.f32 %v164, %v149
  %v219 = vmul.f32 %v164, %v150
  %v220 = vmul.f32 %v164, %v151
  %v221 = vmul.f32 %v164, %v152
  %v222 = vmul.f32 %v164, %v153
  %v223 = vmul.f32 %v165, %v139
  %v224 = vmul.f32 %v165, %v140
  %v225 = vmul.f32 %v165, %v141
  %v226 = vmul.f32 %v165, %v142
  %v227 = vmul.f32 %v165, %v143
  %v228 = vmul.f32 %v165, %v144
  %v229 = vmul.f32 %v165, %v145
  %v230 = vmul.f32 %v165, %v146
  %v231 = vmul.f32 %v165, %v147
  %v232 = vmul.f32 %v165, %v148
  %v233 = vmul.f32 %v165, %v149
  %v234 = vmul.f32 %v165, %v150
  %v235 = vmul.f32 %v165, %v151
  %v236 = vmul.f32 %v165, %v152
  %v237 = vmul.f32 %v165, %v153
  %v238 = vmul.f32 %v166, %v139
  %v239 = vmul.f32 %v166, %v140
  %v240 = vmul.f32 %v166, %v141
  %v241 = vmul.f32 %v166, %v142
  %v242 = vmul.f32 %v166, %v143
  %v243 = vmul.f32 %v166, %v144
  %v244 = vmul.f32 %v166, %v145
  %v245 = vmul.f32 %v166, %v146
  %v246 = vmul.f32 %v166, %v147
  %v247 = vmul.f32 %v166, %v148
  %v248 = vmul.f32 %v166, %v149
  %v249 = vmul.f32 %v166, %v150
  %v250 = vmul.f32 %v166, %v151
  %v251 = vmul.f32 %v166, %v152
  %v252 = vmul.f32 %v166, %v153
  %v253 = vmul.f32 %v167, %v139
  %v254 = vmul.f32 %v167, %v140
  %v255 = vmul.f32 %v167, %v141
  %v256 = vmul.f32 %v167, %v142
  %v257 = vmul.f32 %v167, %v143
  %v258 = vmul.f32 %v167, %v144
  %v259 = vmul.f32 %v167, %v145
  %v260 = vmul.f32 %v167, %v146
  %v261 = vmul.f32 %v167, %v147
  %v262 = vmul.f32 %v167, %v148
  %v263 = vmul.f32 %v167, %v149
  %v264 = vmul.f32 %v167, %v150
  %v265 = vmul.f32 %v167, %v151
  %v266 = vmul.f32 %v167, %v152
  %v267 = vmul.f32 %v167, %v153
  %v268 = vmul.f32 %v168, %v139
  %v269 = vmul.f32 %v168, %v140
  %v270 = vmul.f32 %v168, %v141
  %v271 = vmul.f32 %v168, %v142
  %v272 = vmul.f32 %v168, %v143
  %v273 = vmul.f32 %v168, %v144
  %v274 = vmul.f32 %v168, %v145
  %v275 = vmul.f32 %v168, %v146
  %v276 = vmul.f32 %v168, %v147
  %v277 = vmul.f32 %v168, %v148
  %v278 = vmul.f32 %v168, %v149
  %v279 = vmul.f32 %v168, %v150
  %v280 = vmul.f32 %v168, %v151
  %v281 = vmul.f32 %v168, %v152
  %v282 = vmul.f32 %v168, %v153
  %v283 = vmul.f32 %v169, %v139
  %v284 = vmul.f32 %v169, %v140
  %v285 = vmul.f32 %v169, %v141
  %v286 = vmul.f32 %v169, %v142
  %v287 = vmul.f32 %v169, %v143
  %v288 = vmul.f32 %v169, %v144
  %v289 = vmul.f32 %v169, %v145
  %v290 = vmul.f32 %v169, %v146
  %v291 = vmul.f32 %v169, %v147
  %v292 = vmul.f32 %v169, %v148
  %v293 = vmul.f32 %v169, %v149
  %v294 = vmul.f32 %v169, %v150
  %v295 = vmul.f32 %v169, %v151
  %v296 = vmul.f32 %v169, %v152
  %v297 = vmul.f32 %v169, %v153
  %v298 = vld [vmem:[%s3] sm:$0xff]
  %v299 = vld [vmem:[%s3 + $0x8] sm:$0xff]
  %v300 = vld [vmem:[%s3 + $0x10] sm:$0xff]
  %v301 = vld [vmem:[%s3 + $0x18] sm:$0xff]
  %v302 = vld [vmem:[%s3 + $0x20] sm:$0xff]
  %v303 = vld [vmem:[%s3 + $0x28] sm:$0xff]
  %v304 = vld [vmem:[%s3 + $0x30] sm:$0xff]
  %v305 = vld [vmem:[%s3 + $0x38] sm:$0xff]
  %v306 = vld [vmem:[%s3 + $0x40] sm:$0xff]
  %v307 = vld [vmem:[%s3 + $0x48] sm:$0xff]
  %v308 = vld [vmem:[%s3 + $0x50] sm:$0xff]
  %v309 = vld [vmem:[%s3 + $0x58] sm:$0xff]
  %v310 = vld [vmem:[%s3 + $0x60] sm:$0xff]
  %v311 = vld [vmem:[%s3 + $0x68] sm:$0xff]
  %v312 = vld [vmem:[%s3 + $0x70] sm:$0xff]
  %v313 = vadd.f32 %v178, %v298
  %v314 = vadd.f32 %v179, %v299
  %v315 = vadd.f32 %v180, %v300
  %v316 = vadd.f32 %v181, %v301
  %v317 = vadd.f32 %v182, %v302
  %v318 = vadd.f32 %v183, %v303
  %v319 = vadd.f32 %v184, %v304
  %v320 = vadd.f32 %v185, %v305
  %v321 = vadd.f32 %v186, %v306
  %v322 = vadd.f32 %v187, %v307
  %v323 = vadd.f32 %v188, %v308
  %v324 = vadd.f32 %v189, %v309
  %v325 = vadd.f32 %v190, %v310
  %v326 = vadd.f32 %v191, %v311
  %v327 = vadd.f32 %v192, %v312
  %v328 = vadd.f32 %v193, %v298
  %v329 = vadd.f32 %v194, %v299
  %v330 = vadd.f32 %v195, %v300
  %v331 = vadd.f32 %v196, %v301
  %v332 = vadd.f32 %v197, %v302
  %v333 = vadd.f32 %v198, %v303
  %v334 = vadd.f32 %v199, %v304
  %v335 = vadd.f32 %v200, %v305
  %v336 = vadd.f32 %v201, %v306
  %v337 = vadd.f32 %v202, %v307
  %v338 = vadd.f32 %v203, %v308
  %v339 = vadd.f32 %v204, %v309
  %v340 = vadd.f32 %v205, %v310
  %v341 = vadd.f32 %v206, %v311
  %v342 = vadd.f32 %v207, %v312
  %v343 = vadd.f32 %v208, %v298
  %v344 = vadd.f32 %v209, %v299
  %v345 = vadd.f32 %v210, %v300
  %v346 = vadd.f32 %v211, %v301
  %v347 = vadd.f32 %v212, %v302
  %v348 = vadd.f32 %v213, %v303
  %v349 = vadd.f32 %v214, %v304
  %v350 = vadd.f32 %v215, %v305
  %v351 = vadd.f32 %v216, %v306
  %v352 = vadd.f32 %v217, %v307
  %v353 = vadd.f32 %v218, %v308
  %v354 = vadd.f32 %v219, %v309
  %v355 = vadd.f32 %v220, %v310
  %v356 = vadd.f32 %v221, %v311
  %v357 = vadd.f32 %v222, %v312
  %v358 = vadd.f32 %v223, %v298
  %v359 = vadd.f32 %v224, %v299
  %v360 = vadd.f32 %v225, %v300
  %v361 = vadd.f32 %v226, %v301
  %v362 = vadd.f32 %v227, %v302
  %v363 = vadd.f32 %v228, %v303
  %v364 = vadd.f32 %v229, %v304
  %v365 = vadd.f32 %v230, %v305
  %v366 = vadd.f32 %v231, %v306
  %v367 = vadd.f32 %v232, %v307
  %v368 = vadd.f32 %v233, %v308
  %v369 = vadd.f32 %v234, %v309
  %v370 = vadd.f32 %v235, %v310
  %v371 = vadd.f32 %v236, %v311
  %v372 = vadd.f32 %v237, %v312
  %v373 = vadd.f32 %v238, %v298
  %v374 = vadd.f32 %v239, %v299
  %v375 = vadd.f32 %v240, %v300
  %v376 = vadd.f32 %v241, %v301
  %v377 = vadd.f32 %v242, %v302
  %v378 = vadd.f32 %v243, %v303
  %v379 = vadd.f32 %v244, %v304
  %v380 = vadd.f32 %v245, %v305
  %v381 = vadd.f32 %v246, %v306
  %v382 = vadd.f32 %v247, %v307
  %v383 = vadd.f32 %v248, %v308
  %v384 = vadd.f32 %v249, %v309
  %v385 = vadd.f32 %v250, %v310
  %v386 = vadd.f32 %v251, %v311
  %v387 = vadd.f32 %v252, %v312
  %v388 = vadd.f32 %v253, %v298
  %v389 = vadd.f32 %v254, %v299
  %v390 = vadd.f32 %v255, %v300
  %v391 = vadd.f32 %v256, %v301
  %v392 = vadd.f32 %v257, %v302
  %v393 = vadd.f32 %v258, %v303
  %v394 = vadd.f32 %v259, %v304
  %v395 = vadd.f32 %v260, %v305
  %v396 = vadd.f32 %v261, %v306
  %v397 = vadd.f32 %v262, %v307
  %v398 = vadd.f32 %v263, %v308
  %v399 = vadd.f32 %v264, %v309
  %v400 = vadd.f32 %v265, %v310
  %v401 = vadd.f32 %v266, %v311
  %v402 = vadd.f32 %v267, %v312
  %v403 = vadd.f32 %v268, %v298
  %v404 = vadd.f32 %v269, %v299
  %v405 = vadd.f32 %v270, %v300
  %v406 = vadd.f32 %v271, %v301
  %v407 = vadd.f32 %v272, %v302
  %v408 = vadd.f32 %v273, %v303
  %v409 = vadd.f32 %v274, %v304
  %v410 = vadd.f32 %v275, %v305
  %v411 = vadd.f32 %v276, %v306
  %v412 = vadd.f32 %v277, %v307
  %v413 = vadd.f32 %v278, %v308
  %v414 = vadd.f32 %v279, %v309
  %v415 = vadd.f32 %v280, %v310
  %v416 = vadd.f32 %v281, %v311
  %v417 = vadd.f32 %v282, %v312
  %v418 = vadd.f32 %v283, %v298
  %v419 = vadd.f32 %v284, %v299
  %v420 = vadd.f32 %v285, %v300
  %v421 = vadd.f32 %v286, %v301
  %v422 = vadd.f32 %v287, %v302
  %v423 = vadd.f32 %v288, %v303
  %v424 = vadd.f32 %v289, %v304
  %v425 = vadd.f32 %v290, %v305
  %v426 = vadd.f32 %v291, %v306
  %v427 = vadd.f32 %v292, %v307
  %v428 = vadd.f32 %v293, %v308
  %v429 = vadd.f32 %v294, %v309
  %v430 = vadd.f32 %v295, %v310
  %v431 = vadd.f32 %v296, %v311
  %v432 = vadd.f32 %v297, %v312
  %433 = vst [vmem:[%s4] sm:$0xff] %v313
  %434 = vst [vmem:[%s4 + $0x8] sm:$0xff] %v314
  %435 = vst [vmem:[%s4 + $0x10] sm:$0xff] %v315
  %436 = vst [vmem:[%s4 + $0x18] sm:$0xff] %v316
  %437 = vst [vmem:[%s4 + $0x20] sm:$0xff] %v317
  %438 = vst [vmem:[%s4 + $0x28] sm:$0xff] %v318
  %439 = vst [vmem:[%s4 + $0x30] sm:$0xff] %v319
  %440 = vst [vmem:[%s4 + $0x38] sm:$0xff] %v320
  %441 = vst [vmem:[%s4 + $0x40] sm:$0xff] %v321
  %442 = vst [vmem:[%s4 + $0x48] sm:$0xff] %v322
  %443 = vst [vmem:[%s4 + $0x50] sm:$0xff] %v323
  %444 = vst [vmem:[%s4 + $0x58] sm:$0xff] %v324
  %445 = vst [vmem:[%s4 + $0x60] sm:$0xff] %v325
  %446 = vst [vmem:[%s4 + $0x68] sm:$0xff] %v326
  %447 = vst [vmem:[%s4 + $0x70] sm:$0xff] %v327
  %448 = vst [vmem:[%s4 + $0x78] sm:$0xff] %v328
  %449 = vst [vmem:[%s4 + $0x80] sm:$0xff] %v329
  %450 = vst [vmem:[%s4 + $0x88] sm:$0xff] %v330
  %451 = vst [vmem:[%s4 + $0x90] sm:$0xff] %v331
  %452 = vst [vmem:[%s4 + $0x98] sm:$0xff] %v332
  %453 = vst [vmem:[%s4 + $0xa0] sm:$0xff] %v333
  %454 = vst [vmem:[%s4 + $0xa8] sm:$0xff] %v334
  %455 = vst [vmem:[%s4 + $0xb0] sm:$0xff] %v335
  %456 = vst [vmem:[%s4 + $0xb8] sm:$0xff] %v336
  %457 = vst [vmem:[%s4 + $0xc0] sm:$0xff] %v337
  %458 = vst [vmem:[%s4 + $0xc8] sm:$0xff] %v338
  %459 = vst [vmem:[%s4 + $0xd0] sm:$0xff] %v339
  %460 = vst [vmem:[%s4 + $0xd8] sm:$0xff] %v340
  %461 = vst [vmem:[%s4 + $0xe0] sm:$0xff] %v341
  %462 = vst [vmem:[%s4 + $0xe8] sm:$0xff] %v342
  %463 = vst [vmem:[%s4 + $0xf0] sm:$0xff] %v343
  %464 = vst [vmem:[%s4 + $0xf8] sm:$0xff] %v344
  %465 = vst [vmem:[%s4 + $0x100] sm:$0xff] %v345
  %466 = vst [vmem:[%s4 + $0x108] sm:$0xff] %v346
  %467 = vst [vmem:[%s4 + $0x110] sm:$0xff] %v347
  %468 = vst [vmem:[%s4 + $0x118] sm:$0xff] %v348
  %469 = vst [vmem:[%s4 + $0x120] sm:$0xff] %v349
  %470 = vst [vmem:[%s4 + $0x128] sm:$0xff] %v350
  %471 = vst [vmem:[%s4 + $0x130] sm:$0xff] %v351
  %472 = vst [vmem:[%s4 + $0x138] sm:$0xff] %v352
  %473 = vst [vmem:[%s4 + $0x140] sm:$0xff] %v353
  %474 = vst [vmem:[%s4 + $0x148] sm:$0xff] %v354
  %475 = vst [vmem:[%s4 + $0x150] sm:$0xff] %v355
  %476 = vst [vmem:[%s4 + $0x158] sm:$0xff] %v356
  %477 = vst [vmem:[%s4 + $0x160] sm:$0xff] %v357
  %478 = vst [vmem:[%s4 + $0x168] sm:$0xff] %v358
  %479 = vst [vmem:[%s4 + $0x170] sm:$0xff] %v359
  %480 = vst [vmem:[%s4 + $0x178] sm:$0xff] %v360
  %481 = vst [vmem:[%s4 + $0x180] sm:$0xff] %v361
  %482 = vst [vmem:[%s4 + $0x188] sm:$0xff] %v362
  %483 = vst [vmem:[%s4 + $0x190] sm:$0xff] %v363
  %484 = vst [vmem:[%s4 + $0x198] sm:$0xff] %v364
  %485 = vst [vmem:[%s4 + $0x1a0] sm:$0xff] %v365
  %486 = vst [vmem:[%s4 + $0x1a8] sm:$0xff] %v366
  %487 = vst [vmem:[%s4 + $0x1b0] sm:$0xff] %v367
  %488 = vst [vmem:[%s4 + $0x1b8] sm:$0xff] %v368
  %489 = vst [vmem:[%s4 + $0x1c0] sm:$0xff] %v369
  %490 = vst [vmem:[%s4 + $0x1c8] sm:$0xff] %v370
  %491 = vst [vmem:[%s4 + $0x1d0] sm:$0xff] %v371
  %492 = vst [vmem:[%s4 + $0x1d8] sm:$0xff] %v372
  %493 = vst [vmem:[%s4 + $0x1e0] sm:$0xff] %v373
  %494 = vst [vmem:[%s4 + $0x1e8] sm:$0xff] %v374
  %495 = vst [vmem:[%s4 + $0x1f0] sm:$0xff] %v375
  %496 = vst [vmem:[%s4 + $0x1f8] sm:$0xff] %v376
  %497 = vst [vmem:[%s4 + $0x200] sm:$0xff] %v377
  %498 = vst [vmem:[%s4 + $0x208] sm:$0xff] %v378
  %499 = vst [vmem:[%s4 + $0x210] sm:$0xff] %v379
  %500 = vst [vmem:[%s4 + $0x218] sm:$0xff] %v380
  %501 = vst [vmem:[%s4 + $0x220] sm:$0xff] %v381
  %502 = vst [vmem:[%s4 + $0x228] sm:$0xff] %v382
  %503 = vst [vmem:[%s4 + $0x230] sm:$0xff] %v383
  %504 = vst [vmem:[%s4 + $0x238] sm:$0xff] %v384
  %505 = vst [vmem:[%s4 + $0x240] sm:$0xff] %v385
  %506 = vst [vmem:[%s4 + $0x248] sm:$0xff] %v386
  %507 = vst [vmem:[%s4 + $0x250] sm:$0xff] %v387
  %508 = vst [vmem:[%s4 + $0x258] sm:$0xff] %v388
  %509 = vst [vmem:[%s4 + $0x260] sm:$0xff] %v389
  %510 = vst [vmem:[%s4 + $0x268] sm:$0xff] %v390
  %511 = vst [vmem:[%s4 + $0x270] sm:$0xff] %v391
  %512 = vst [vmem:[%s4 + $0x278] sm:$0xff] %v392
  %513 = vst [vmem:[%s4 + $0x280] sm:$0xff] %v393
  %514 = vst [vmem:[%s4 + $0x288] sm:$0xff] %v394
  %515 = vst [vmem:[%s4 + $0x290] sm:$0xff] %v395
  %516 = vst [vmem:[%s4 + $0x298] sm:$0xff] %v396
  %517 = vst [vmem:[%s4 + $0x2a0] sm:$0xff] %v397
  %518 = vst [vmem:[%s4 + $0x2a8] sm:$0xff] %v398
  %519 = vst [vmem:[%s4 + $0x2b0] sm:$0xff] %v399
  %520 = vst [vmem:[%s4 + $0x2b8] sm:$0xff] %v400
  %521 = vst [vmem:[%s4 + $0x2c0] sm:$0xff] %v401
  %522 = vst [vmem:[%s4 + $0x2c8] sm:$0xff] %v402
  %523 = vst [vmem:[%s4 + $0x2d0] sm:$0xff] %v403
  %524 = vst [vmem:[%s4 + $0x2d8] sm:$0xff] %v404
  %525 = vst [vmem:[%s4 + $0x2e0] sm:$0xff] %v405
  %526 = vst [vmem:[%s4 + $0x2e8] sm:$0xff] %v406
  %527 = vst [vmem:[%s4 + $0x2f0] sm:$0xff] %v407
  %528 = vst [vmem:[%s4 + $0x2f8] sm:$0xff] %v408
  %529 = vst [vmem:[%s4 + $0x300] sm:$0xff] %v409
  %530 = vst [vmem:[%s4 + $0x308] sm:$0xff] %v410
  %531 = vst [vmem:[%s4 + $0x310] sm:$0xff] %v411
  %532 = vst [vmem:[%s4 + $0x318] sm:$0xff] %v412
  %533 = vst [vmem:[%s4 + $0x320] sm:$0xff] %v413
  %534 = vst [vmem:[%s4 + $0x328] sm:$0xff] %v414
  %535 = vst [vmem:[%s4 + $0x330] sm:$0xff] %v415
  %536 = vst [vmem:[%s4 + $0x338] sm:$0xff] %v416
  %537 = vst [vmem:[%s4 + $0x340] sm:$0xff] %v417
  %538 = vst [vmem:[%s4 + $0x348] sm:$0xff] %v418
  %539 = vst [vmem:[%s4 + $0x350] sm:$0xff] %v419
  %540 = vst [vmem:[%s4 + $0x358] sm:$0xff] %v420
  %541 = vst [vmem:[%s4 + $0x360] sm:$0xff] %v421
  %542 = vst [vmem:[%s4 + $0x368] sm:$0xff] %v422
  %543 = vst [vmem:[%s4 + $0x370] sm:$0xff] %v423
  %544 = vst [vmem:[%s4 + $0x378] sm:$0xff] %v424
  %545 = vst [vmem:[%s4 + $0x380] sm:$0xff] %v425
  %546 = vst [vmem:[%s4 + $0x388] sm:$0xff] %v426
  %547 = vst [vmem:[%s4 + $0x390] sm:$0xff] %v427
  %548 = vst [vmem:[%s4 + $0x398] sm:$0xff] %v428
  %549 = vst [vmem:[%s4 + $0x3a0] sm:$0xff] %v429
  %550 = vst [vmem:[%s4 + $0x3a8] sm:$0xff] %v430
  %551 = vst [vmem:[%s4 + $0x3b0] sm:$0xff] %v431
  %552 = vst [vmem:[%s4 + $0x3b8] sm:$0xff] %v432
  // Predicated region
  $region18: #{upsampling_forward.1} parent=0 // pred_check
    _
  $region19: #{upsampling_forward.1} parent=0 // pred_check_branch
    %554 = sbr.rel (0) target = $region21
  $region20: #{upsampling_forward.1} parent=0 // pred_region
    _
  $region21: #{upsampling_forward.1} parent=0 // pred_fallthru
    _
  // Predicated region
  $region22: #{upsampling_forward.1} parent=0 // pred_check
    _
  $region23: #{upsampling_forward.1} parent=0 // pred_check_branch
    %556 = sbr.rel (0) target = $region25
  $region24: #{upsampling_forward.1} parent=0 // pred_region
    _
  $region25: #{upsampling_forward.1} parent=0 // pred_fallthru
    _

</llo_original>
